<compile_context>
chip_gen: v6e
topology: v6e:2x2x1
jax: 0.10.0
libtpu: 0.0.40
codegen_flags: <defaults>
</compile_context>

<pallas_src>
import jax
import jax.numpy as jnp
from jax.experimental import pallas as pl
from jax.experimental.pallas import tpu as pltpu


def simplenet_kernel(params_ref, x_ref, y_ref, w1_ref, p_ref, loss_ref):
    # params_ref (SMEM, f32[8]): [b1_0, b1_1, w2_0, w2_1, b2, pad, pad, pad]
    x = x_ref[...]                                   # (TB, D) f32
    w1 = w1_ref[...]                                 # (2, D)  f32, lane-dense

    b1_0 = params_ref[0]
    b1_1 = params_ref[1]
    w2_0 = params_ref[2]
    w2_1 = params_ref[3]
    b2 = params_ref[4]

    # fc1 + ReLU on the VPU/XLU: two broadcast multiplies + two lane reduces.
    h0 = jnp.maximum(
        jnp.sum(x * w1[0:1, :], axis=-1, keepdims=True) + b1_0, 0.0)  # (TB, 1)
    h1 = jnp.maximum(
        jnp.sum(x * w1[1:2, :], axis=-1, keepdims=True) + b1_1, 0.0)  # (TB, 1)

    # fc2 -> logits: two scalar FMAs + bias.
    z = h0 * w2_0 + h1 * w2_1 + b2                   # (TB, 1)

    # Sigmoid (exact; approx reciprocal skipped to stay within 1e-5 of ref).
    p = 1.0 / (1.0 + jnp.exp(-z))
    p_ref[...] = p

    # BCE from logits (numerically stable softplus form), mean handled in the
    # wrapper.  Matches PyTorch BCELoss' clamp of log terms at -100.
    y = y_ref[...]                                   # (TB, 1)
    e = jnp.exp(-jnp.abs(z))
    lse = jnp.log(1.0 + e)                           # log(1 + exp(-|z|))
    log_p = jnp.maximum(-(jnp.maximum(-z, 0.0) + lse), -100.0)
    log_1mp = jnp.maximum(-(jnp.maximum(z, 0.0) + lse), -100.0)
    bce = -(y * log_p + (1.0 - y) * log_1mp)         # (TB, 1)
    loss_ref[0, 0] = jnp.sum(bce)                    # per-tile partial sum


def simplenet_forward(state, label, w1, b1, w2, b2, *, tile_b=512):
    """Forward pass. Weights use PyTorch layout: w1 (2, D), b1 (2,), w2 (1, 2), b2 (1,)."""
    B, D = state.shape
    TB = B if B <= tile_b else tile_b                # single tile for small B
    assert B % TB == 0, "batch must be divisible by the batch tile"
    num_tiles = B // TB

    # Pack the 5 tiny parameters into one SMEM-resident array.
    params = jnp.concatenate([
        b1.reshape(-1), w2.reshape(-1), b2.reshape(-1),
        jnp.zeros((3,), jnp.float32),
    ]).astype(jnp.float32)                           # (8,)

    out, loss_part = pl.pallas_call(
        simplenet_kernel,
        out_shape=(
            jax.ShapeDtypeStruct((B, 1), jnp.float32),          # sigmoid output
            jax.ShapeDtypeStruct((num_tiles, 1), jnp.float32),  # per-tile BCE sums
        ),
        grid=(num_tiles,),
        in_specs=[
            pl.BlockSpec(memory_space=pltpu.SMEM),              # packed scalars
            pl.BlockSpec((TB, D), lambda i: (i, 0)),            # state tile
            pl.BlockSpec((TB, 1), lambda i: (i, 0)),            # label tile
            pl.BlockSpec((2, D), lambda i: (0, 0)),             # w1 (resident)
        ],
        out_specs=(
            pl.BlockSpec((TB, 1), lambda i: (i, 0)),            # probabilities
            pl.BlockSpec((1, 1), lambda i: (i, 0),
                         memory_space=pltpu.SMEM),              # scalar loss sum
        ),
        compiler_params=pltpu.CompilerParams(
            dimension_semantics=("parallel",)),
    )(params, state, label, w1)

    loss = jnp.sum(loss_part) / B                    # BCELoss mean reduction
    return out, loss


def init_params(key, input_dim):
    # nn.Linear-style U(-1/sqrt(fan_in), 1/sqrt(fan_in)) init, PyTorch layout.
    k1, k2, k3, k4 = jax.random.split(key, 4)
    lim1 = 1.0 / jnp.sqrt(float(input_dim))
    w1 = jax.random.uniform(k1, (2, input_dim), jnp.float32, -lim1, lim1)
    b1 = jax.random.uniform(k2, (2,), jnp.float32, -lim1, lim1)
    lim2 = 1.0 / jnp.sqrt(2.0)
    w2 = jax.random.uniform(k3, (1, 2), jnp.float32, -lim2, lim2)
    b2 = jax.random.uniform(k4, (1,), jnp.float32, -lim2, lim2)
    return w1, b1, w2, b2


if __name__ == "__main__":
    input_dim = 2304   # module default
    batch = 8          # small demo batch (kernel is launch-overhead-bound here)

    key = jax.random.PRNGKey(0)
    k_param, k_state, k_label = jax.random.split(key, 3)

    w1, b1, w2, b2 = init_params(k_param, input_dim)
    state = jax.random.normal(k_state, (batch, input_dim), jnp.float32)
    label = (jax.random.uniform(k_label, (batch, 1)) > 0.5).astype(jnp.float32)

    out, loss = simplenet_forward(state, label, w1, b1, w2, b2)
    jax.block_until_ready((out, loss))

    # Pure-JAX reference check (PyTorch semantics: y = x @ W.T + b).
    h_ref = jnp.maximum(state @ w1.T + b1.reshape(1, -1), 0.0)
    p_ref = jax.nn.sigmoid(h_ref @ w2.T + b2.reshape(1, -1))
    bce_ref = jnp.mean(-(label * jnp.log(p_ref) +
                         (1.0 - label) * jnp.log(1.0 - p_ref)))
    assert jnp.allclose(out, p_ref, atol=2e-5), "output mismatch"
    assert jnp.allclose(loss, bce_ref, atol=2e-5), "loss mismatch"

    print("KERNEL_OK")
</pallas_src>

<mosaic_0001>
module attributes {stable_mosaic.version = 11 : i64} {
  func.func @simplenet_kernel(%arg0: i32, %arg1: memref<8xf32, #tpu.memory_space<smem>>, %arg2: memref<8x2304xf32, #tpu.memory_space<vmem>>, %arg3: memref<8x1xf32, #tpu.memory_space<vmem>>, %arg4: memref<2x2304xf32, #tpu.memory_space<vmem>>, %arg5: memref<8x1xf32, #tpu.memory_space<vmem>>, %arg6: memref<1x1xf32, #tpu.memory_space<smem>>) attributes {dimension_semantics = [#tpu.dimension_semantics<parallel>], iteration_bounds = array<i64: 1>, scalar_prefetch = 0 : i64, scratch_operands = 0 : i64, tpu.core_type = #tpu.core_type<tc>, window_params = [{transform_indices = @transform_0, window_bounds = array<i64: 8>}, {transform_indices = @transform_1, window_bounds = array<i64: 8, 2304>}, {transform_indices = @transform_2, window_bounds = array<i64: 8, 1>}, {pipeline_mode = #tpu.pipeline_mode<synchronous>, transform_indices = @transform_3, window_bounds = array<i64: 2, 2304>}, {transform_indices = @transform_4, window_bounds = array<i64: 8, 1>}, {transform_indices = @transform_5, window_bounds = array<i64: 1, 1>}]} {
    %c0 = arith.constant 0 : index
    %c0_0 = arith.constant 0 : index
    %0 = vector.load %arg2[%c0, %c0_0] : memref<8x2304xf32, #tpu.memory_space<vmem>>, vector<8x2304xf32>
    %c0_1 = arith.constant 0 : index
    %c0_2 = arith.constant 0 : index
    %1 = vector.load %arg4[%c0_1, %c0_2] : memref<2x2304xf32, #tpu.memory_space<vmem>>, vector<2x2304xf32>
    %c0_3 = arith.constant 0 : index
    %2 = memref.load %arg1[%c0_3] : memref<8xf32, #tpu.memory_space<smem>>
    %c1 = arith.constant 1 : index
    %3 = memref.load %arg1[%c1] : memref<8xf32, #tpu.memory_space<smem>>
    %c2 = arith.constant 2 : index
    %4 = memref.load %arg1[%c2] : memref<8xf32, #tpu.memory_space<smem>>
    %c3 = arith.constant 3 : index
    %5 = memref.load %arg1[%c3] : memref<8xf32, #tpu.memory_space<smem>>
    %c4 = arith.constant 4 : index
    %6 = memref.load %arg1[%c4] : memref<8xf32, #tpu.memory_space<smem>>
    %7 = vector.extract_strided_slice %1 {offsets = [0, 0], sizes = [1, 2304], strides = [1, 1]} : vector<2x2304xf32> to vector<1x2304xf32>
    %8 = vector.broadcast %7 : vector<1x2304xf32> to vector<8x2304xf32>
    %9 = arith.mulf %0, %8 : vector<8x2304xf32>
    %cst = arith.constant dense<0.000000e+00> : vector<8xf32>
    %10 = vector.multi_reduction <add>, %9, %cst [1] : vector<8x2304xf32> to vector<8xf32>
    %11 = vector.shape_cast %10 : vector<8xf32> to vector<8x1xf32>
    %12 = vector.broadcast %2 : f32 to vector<8x1xf32>
    %13 = arith.addf %11, %12 : vector<8x1xf32>
    %cst_4 = arith.constant 0.000000e+00 : f32
    %14 = vector.broadcast %cst_4 : f32 to vector<8x1xf32>
    %15 = arith.maximumf %13, %14 : vector<8x1xf32>
    %16 = vector.extract_strided_slice %1 {offsets = [1, 0], sizes = [1, 2304], strides = [1, 1]} : vector<2x2304xf32> to vector<1x2304xf32>
    %17 = vector.broadcast %16 : vector<1x2304xf32> to vector<8x2304xf32>
    %18 = arith.mulf %0, %17 : vector<8x2304xf32>
    %cst_5 = arith.constant dense<0.000000e+00> : vector<8xf32>
    %19 = vector.multi_reduction <add>, %18, %cst_5 [1] : vector<8x2304xf32> to vector<8xf32>
    %20 = vector.shape_cast %19 : vector<8xf32> to vector<8x1xf32>
    %21 = vector.broadcast %3 : f32 to vector<8x1xf32>
    %22 = arith.addf %20, %21 : vector<8x1xf32>
    %cst_6 = arith.constant 0.000000e+00 : f32
    %23 = vector.broadcast %cst_6 : f32 to vector<8x1xf32>
    %24 = arith.maximumf %22, %23 : vector<8x1xf32>
    %25 = vector.broadcast %4 : f32 to vector<8x1xf32>
    %26 = arith.mulf %15, %25 : vector<8x1xf32>
    %27 = vector.broadcast %5 : f32 to vector<8x1xf32>
    %28 = arith.mulf %24, %27 : vector<8x1xf32>
    %29 = arith.addf %26, %28 : vector<8x1xf32>
    %30 = vector.broadcast %6 : f32 to vector<8x1xf32>
    %31 = arith.addf %29, %30 : vector<8x1xf32>
    %cst_7 = arith.constant 0.000000e+00 : f32
    %32 = vector.broadcast %cst_7 : f32 to vector<8x1xf32>
    %33 = arith.subf %32, %31 : vector<8x1xf32>
    %34 = math.exp %33 : vector<8x1xf32>
    %cst_8 = arith.constant 1.000000e+00 : f32
    %35 = vector.broadcast %cst_8 : f32 to vector<8x1xf32>
    %36 = arith.addf %35, %34 : vector<8x1xf32>
    %cst_9 = arith.constant 1.000000e+00 : f32
    %37 = vector.broadcast %cst_9 : f32 to vector<8x1xf32>
    %38 = arith.divf %37, %36 : vector<8x1xf32>
    %c0_10 = arith.constant 0 : index
    %c0_11 = arith.constant 0 : index
    %39 = vector.load %arg5[%c0_10, %c0_11] : memref<8x1xf32, #tpu.memory_space<vmem>>, vector<8x1xf32>
    tpu.vector_store %arg5[%c0_10, %c0_11], %38 {strides = array<i32>} : memref<8x1xf32, #tpu.memory_space<vmem>>, vector<8x1xf32>,
    %c0_12 = arith.constant 0 : index
    %c0_13 = arith.constant 0 : index
    %40 = vector.load %arg3[%c0_12, %c0_13] : memref<8x1xf32, #tpu.memory_space<vmem>>, vector<8x1xf32>
    %41 = math.absf %31 : vector<8x1xf32>
    %cst_14 = arith.constant 0.000000e+00 : f32
    %42 = vector.broadcast %cst_14 : f32 to vector<8x1xf32>
    %43 = arith.subf %42, %41 : vector<8x1xf32>
    %44 = math.exp %43 : vector<8x1xf32>
    %cst_15 = arith.constant 1.000000e+00 : f32
    %45 = vector.broadcast %cst_15 : f32 to vector<8x1xf32>
    %46 = arith.addf %45, %44 : vector<8x1xf32>
    %47 = math.log %46 : vector<8x1xf32>
    %cst_16 = arith.constant 0.000000e+00 : f32
    %48 = vector.broadcast %cst_16 : f32 to vector<8x1xf32>
    %49 = arith.subf %48, %31 : vector<8x1xf32>
    %cst_17 = arith.constant 0.000000e+00 : f32
    %50 = vector.broadcast %cst_17 : f32 to vector<8x1xf32>
    %51 = arith.maximumf %49, %50 : vector<8x1xf32>
    %52 = arith.addf %51, %47 : vector<8x1xf32>
    %cst_18 = arith.constant 0.000000e+00 : f32
    %53 = vector.broadcast %cst_18 : f32 to vector<8x1xf32>
    %54 = arith.subf %53, %52 : vector<8x1xf32>
    %cst_19 = arith.constant -1.000000e+02 : f32
    %55 = vector.broadcast %cst_19 : f32 to vector<8x1xf32>
    %56 = arith.maximumf %54, %55 : vector<8x1xf32>
    %cst_20 = arith.constant 0.000000e+00 : f32
    %57 = vector.broadcast %cst_20 : f32 to vector<8x1xf32>
    %58 = arith.maximumf %31, %57 : vector<8x1xf32>
    %59 = arith.addf %58, %47 : vector<8x1xf32>
    %cst_21 = arith.constant 0.000000e+00 : f32
    %60 = vector.broadcast %cst_21 : f32 to vector<8x1xf32>
    %61 = arith.subf %60, %59 : vector<8x1xf32>
    %cst_22 = arith.constant -1.000000e+02 : f32
    %62 = vector.broadcast %cst_22 : f32 to vector<8x1xf32>
    %63 = arith.maximumf %61, %62 : vector<8x1xf32>
    %64 = arith.mulf %40, %56 : vector<8x1xf32>
    %cst_23 = arith.constant 1.000000e+00 : f32
    %65 = vector.broadcast %cst_23 : f32 to vector<8x1xf32>
    %66 = arith.subf %65, %40 : vector<8x1xf32>
    %67 = arith.mulf %66, %63 : vector<8x1xf32>
    %68 = arith.addf %64, %67 : vector<8x1xf32>
    %cst_24 = arith.constant 0.000000e+00 : f32
    %69 = vector.broadcast %cst_24 : f32 to vector<8x1xf32>
    %70 = arith.subf %69, %68 : vector<8x1xf32>
    %71 = vector.shape_cast %70 : vector<8x1xf32> to vector<1x8x1xf32>
    %cst_25 = arith.constant dense<0.000000e+00> : vector<1xf32>
    %72 = vector.multi_reduction <add>, %71, %cst_25 [1, 2] : vector<1x8x1xf32> to vector<1xf32>
    %73 = vector.shape_cast %72 : vector<1xf32> to vector<1x1x1xf32>
    %74 = vector.extract %73[0, 0, 0] : f32 from vector<1x1x1xf32>
    %c0_26 = arith.constant 0 : index
    %c0_27 = arith.constant 0 : index
    %75 = memref.load %arg6[%c0_26, %c0_27] : memref<1x1xf32, #tpu.memory_space<smem>>
    memref.store %74, %arg6[%c0_26, %c0_27] : memref<1x1xf32, #tpu.memory_space<smem>>
    return
  }
  func.func @transform_0(%arg0: i32) -> i32 {
    %c0_i32 = arith.constant 0 : i32
    %c0_i32_0 = arith.constant 0 : i32
    return %c0_i32 : i32
  }
  func.func @transform_1(%arg0: i32) -> (i32, i32) {
    %c0_i32 = arith.constant 0 : i32
    %c0_i32_0 = arith.constant 0 : i32
    return %arg0, %c0_i32 : i32, i32
  }
  func.func @transform_2(%arg0: i32) -> (i32, i32) {
    %c0_i32 = arith.constant 0 : i32
    %c0_i32_0 = arith.constant 0 : i32
    return %arg0, %c0_i32 : i32, i32
  }
  func.func @transform_3(%arg0: i32) -> (i32, i32) {
    %c0_i32 = arith.constant 0 : i32
    %c0_i32_0 = arith.constant 0 : i32
    %c0_i32_1 = arith.constant 0 : i32
    return %c0_i32, %c0_i32_0 : i32, i32
  }
  func.func @transform_4(%arg0: i32) -> (i32, i32) {
    %c0_i32 = arith.constant 0 : i32
    %c0_i32_0 = arith.constant 0 : i32
    return %arg0, %c0_i32 : i32, i32
  }
  func.func @transform_5(%arg0: i32) -> (i32, i32) {
    %c0_i32 = arith.constant 0 : i32
    %c0_i32_0 = arith.constant 0 : i32
    return %arg0, %c0_i32 : i32, i32
  }
}

</mosaic_0001>

<llo_original>
// kernel: tpu_custom_call.1
$region0: #{tpu_custom_call.1}
  #allocation0 [shape = 'u32[]', space=smem, size = 0x4, offset = 0x4, fixed_abs, tag = 'smem constant byte address 0x4 - core index']
  #allocation1 [shape = 'u32[144,128]{1,0:T(1,128)}', space=vmem, size = 0x12000, scoped, tag = 'internal scratch']
  %s0 = inlined_call_operand.vmem [shape: f32[8], index: 0, kind: input, shape index: {}]
  %s1 = inlined_call_operand.hbm [shape: f32[8,2304], index: 1, kind: input, shape index: {}]
  %s2 = inlined_call_operand.vmem [shape: f32[8,1], index: 2, kind: input, shape index: {}]
  %s3 = inlined_call_operand.hbm [shape: f32[2,2304], index: 3, kind: input, shape index: {}]
  %s4 = inlined_call_operand.vmem [shape: f32[8,1], index: 4, kind: output, shape index: {0}]
  %s5 = inlined_call_operand.hbm [shape: f32[1,1], index: 5, kind: output, shape index: {1}]
  %6 = xla_tuple %s4, %s5
  %s7 = sld [smem:[#allocation0]]
  $region46: #{tpu_custom_call.1} parent=0
    _
  %s9 = ssub.s32 1, %s7
  %s10 = scalar_select 0, %s9, %s7
  $region1: #{tpu_custom_call.1} parent=0
    #allocation2 [shape = 'u8[512]{0}', space=smem, size = 0x200, scoped, tag = 'input window, operand 0, single buffered']
    #allocation3 [shape = 's32[1]{0}', space=sflag, size = 0x4, scoped, tag = 'scoped memory for tpu_custom_call.1']
    #allocation4 [shape = 's32[1]{0}', space=sflag, size = 0x4, scoped, tag = 'scoped memory for tpu_custom_call.1']
    #allocation5 [shape = 's32[1]{0}', space=sflag, size = 0x4, scoped, tag = 'scoped memory for tpu_custom_call.1']
    #allocation6 [shape = 'u8[73728]{0}', space=vmem, size = 0x12000, scoped, tag = 'input window, operand 1, single buffered']
    #allocation7 [shape = 'u8[18432]{0}', space=vmem, size = 0x4800, scoped, tag = 'input window, operand 3, single buffered']
    #allocation8 [shape = 's32[1]{0}', space=sflag, size = 0x4, scoped, tag = 'scoped memory for tpu_custom_call.1']
    #allocation9 [shape = 'u8[512]{0}', space=smem, size = 0x200, scoped, tag = 'output window, operand 1, single buffered']
    %11 = vsyncpa [#allocation5], 0
    %12 = vsyncpa [#allocation3], 0
    %13 = vsyncpa [#allocation8], 0
    %14 = vsyncpa [#allocation4], 0
    // Predicated region
    $region2: #{tpu_custom_call.1} parent=1 // pred_check
      _
    $region3: #{tpu_custom_call.1} parent=1 // pred_check_branch
      %16 = sbr.rel (0) target = $region5
    $region4: #{tpu_custom_call.1} parent=1 // pred_region
      %s18 = ssub.s32 16, 16
      %19 = vsyncadd [#allocation5], %s18
      %s21 = sshll.u32 %s0, 4
      %s22 = int_to_ptr.vmem [resolvable:$true] %s21
      %24 = dma.vmem_to_smem %s22, 16, [#allocation2], [#allocation5]
    $region5: #{tpu_custom_call.1} parent=1 // pred_fallthru
      _
    // Predicated region
    $region6: #{tpu_custom_call.1} parent=1 // pred_check
      _
    $region7: #{tpu_custom_call.1} parent=1 // pred_check_branch
      %26 = sbr.rel (0) target = $region9
    $region8: #{tpu_custom_call.1} parent=1 // pred_region
      %s28 = ssub.s32 2304, 2304
      %29 = vsyncadd [#allocation3], %s28
      %s31 = sshll.u32 [#allocation6], 4
      %s32 = int_to_ptr.vmem [resolvable:$true] %s31
      %34 = dma.hbm_to_vmem [thread:$0]  %s1, 2304, %s32, [#allocation3]
    $region9: #{tpu_custom_call.1} parent=1 // pred_fallthru
      _
    // Predicated region
    $region10: #{tpu_custom_call.1} parent=1 // pred_check
      _
    $region11: #{tpu_custom_call.1} parent=1 // pred_check_branch
      %36 = sbr.rel (0) target = $region13
    $region12: #{tpu_custom_call.1} parent=1 // pred_region
      _
    $region13: #{tpu_custom_call.1} parent=1 // pred_fallthru
      _
    // Predicated region
    $region14: #{tpu_custom_call.1} parent=1 // pred_check
      _
    $region15: #{tpu_custom_call.1} parent=1 // pred_check_branch
      %38 = sbr.rel (0) target = $region17
    $region16: #{tpu_custom_call.1} parent=1 // pred_region
      %s40 = ssub.s32 576, 576
      %41 = vsyncadd [#allocation8], %s40
      %s43 = sshll.u32 [#allocation7], 4
      %s44 = int_to_ptr.vmem [resolvable:$true] %s43
      %46 = dma.hbm_to_vmem [thread:$0]  %s3, 576, %s44, [#allocation8]
    $region17: #{tpu_custom_call.1} parent=1 // pred_fallthru
      _
    // Predicated region
    $region18: #{tpu_custom_call.1} parent=1 // pred_check
      _
    $region19: #{tpu_custom_call.1} parent=1 // pred_check_branch
      %48 = sbr.rel (0) target = $region21
    $region20: #{tpu_custom_call.1} parent=1 // pred_region
      %49 = dma.done [#allocation5], 16
    $region21: #{tpu_custom_call.1} parent=1 // pred_fallthru
      _
    // Predicated region
    $region22: #{tpu_custom_call.1} parent=1 // pred_check
      _
    $region23: #{tpu_custom_call.1} parent=1 // pred_check_branch
      %51 = sbr.rel (0) target = $region25
    $region24: #{tpu_custom_call.1} parent=1 // pred_region
      %52 = dma.done [#allocation3], 2304
    $region25: #{tpu_custom_call.1} parent=1 // pred_fallthru
      _
    // Predicated region
    $region26: #{tpu_custom_call.1} parent=1 // pred_check
      _
    $region27: #{tpu_custom_call.1} parent=1 // pred_check_branch
      %54 = sbr.rel (0) target = $region29
    $region28: #{tpu_custom_call.1} parent=1 // pred_region
      %55 = dma.done [#allocation8], 576
    $region29: #{tpu_custom_call.1} parent=1 // pred_fallthru
      _
    %56 = sfence
    %v57 = vld [vmem:[#allocation6] sm:$0xff]
    %v58 = vld [vmem:[#allocation6 + $0x8] sm:$0xff]
    %v59 = vld [vmem:[#allocation6 + $0x10] sm:$0xff]
    %v60 = vld [vmem:[#allocation6 + $0x18] sm:$0xff]
    %v61 = vld [vmem:[#allocation6 + $0x20] sm:$0xff]
    %v62 = vld [vmem:[#allocation6 + $0x28] sm:$0xff]
    %v63 = vld [vmem:[#allocation6 + $0x30] sm:$0xff]
    %v64 = vld [vmem:[#allocation6 + $0x38] sm:$0xff]
    %v65 = vld [vmem:[#allocation6 + $0x40] sm:$0xff]
    %v66 = vld [vmem:[#allocation6 + $0x48] sm:$0xff]
    %v67 = vld [vmem:[#allocation6 + $0x50] sm:$0xff]
    %v68 = vld [vmem:[#allocation6 + $0x58] sm:$0xff]
    %v69 = vld [vmem:[#allocation6 + $0x60] sm:$0xff]
    %v70 = vld [vmem:[#allocation6 + $0x68] sm:$0xff]
    %v71 = vld [vmem:[#allocation6 + $0x70] sm:$0xff]
    %v72 = vld [vmem:[#allocation6 + $0x78] sm:$0xff]
    %v73 = vld [vmem:[#allocation6 + $0x80] sm:$0xff]
    %v74 = vld [vmem:[#allocation6 + $0x88] sm:$0xff]
    %v75 = vld [vmem:[#allocation7] sm:$0xff]
    %v76 = vld [vmem:[#allocation7 + $0x8] sm:$0xff]
    %v77 = vld [vmem:[#allocation7 + $0x10] sm:$0xff]
    %v78 = vld [vmem:[#allocation7 + $0x18] sm:$0xff]
    %v79 = vld [vmem:[#allocation7 + $0x20] sm:$0xf]
    %s80 = sld [smem:[#allocation2]]
    %s81 = sld [smem:[#allocation2 + $0x1]]
    %s82 = sld [smem:[#allocation2 + $0x2]]
    %s83 = sld [smem:[#allocation2 + $0x3]]
    %s84 = sld [smem:[#allocation2 + $0x4]]
    %v90 = vlaneseq
    %v91 = vshrl.u32 %v90, 7
    %v92 = vsub.s32 0, %v91
    %v93 = vrot.slane %v75, %v92
    %v94 = vlaneseq
    %v95 = vshrl.u32 %v94, 7
    %v96 = vsub.s32 2, %v95
    %v97 = vrot.slane %v75, %v96
    %v98 = vlaneseq
    %v99 = vshrl.u32 %v98, 7
    %v100 = vsub.s32 4, %v99
    %v101 = vrot.slane %v75, %v100
    %v102 = vlaneseq
    %v103 = vshrl.u32 %v102, 7
    %v104 = vsub.s32 6, %v103
    %v105 = vrot.slane %v75, %v104
    %v106 = vlaneseq
    %v107 = vshrl.u32 %v106, 7
    %v108 = vsub.s32 0, %v107
    %v109 = vrot.slane %v76, %v108
    %v110 = vlaneseq
    %v111 = vshrl.u32 %v110, 7
    %v112 = vsub.s32 2, %v111
    %v113 = vrot.slane %v76, %v112
    %v114 = vlaneseq
    %v115 = vshrl.u32 %v114, 7
    %v116 = vsub.s32 4, %v115
    %v117 = vrot.slane %v76, %v116
    %v118 = vlaneseq
    %v119 = vshrl.u32 %v118, 7
    %v120 = vsub.s32 6, %v119
    %v121 = vrot.slane %v76, %v120
    %v122 = vlaneseq
    %v123 = vshrl.u32 %v122, 7
    %v124 = vsub.s32 0, %v123
    %v125 = vrot.slane %v77, %v124
    %v126 = vlaneseq
    %v127 = vshrl.u32 %v126, 7
    %v128 = vsub.s32 2, %v127
    %v129 = vrot.slane %v77, %v128
    %v130 = vlaneseq
    %v131 = vshrl.u32 %v130, 7
    %v132 = vsub.s32 4, %v131
    %v133 = vrot.slane %v77, %v132
    %v134 = vlaneseq
    %v135 = vshrl.u32 %v134, 7
    %v136 = vsub.s32 6, %v135
    %v137 = vrot.slane %v77, %v136
    %v138 = vlaneseq
    %v139 = vshrl.u32 %v138, 7
    %v140 = vsub.s32 0, %v139
    %v141 = vrot.slane %v78, %v140
    %v142 = vlaneseq
    %v143 = vshrl.u32 %v142, 7
    %v144 = vsub.s32 2, %v143
    %v145 = vrot.slane %v78, %v144
    %v146 = vlaneseq
    %v147 = vshrl.u32 %v146, 7
    %v148 = vsub.s32 4, %v147
    %v149 = vrot.slane %v78, %v148
    %v150 = vlaneseq
    %v151 = vshrl.u32 %v150, 7
    %v152 = vsub.s32 6, %v151
    %v153 = vrot.slane %v78, %v152
    %v154 = vlaneseq
    %v155 = vshrl.u32 %v154, 7
    %v156 = vsub.s32 0, %v155
    %v157 = vrot.slane %v79, %v156
    %v158 = vlaneseq
    %v159 = vshrl.u32 %v158, 7
    %v160 = vsub.s32 2, %v159
    %v161 = vrot.slane %v79, %v160
    %v180 = vlaneseq
    %v181 = vshrl.u32 %v180, 7
    %v182 = vsub.s32 0, %v181
    %v183 = vrot.slane %v93, %v182
    %v184 = vlaneseq
    %v185 = vshrl.u32 %v184, 7
    %v186 = vsub.s32 0, %v185
    %v187 = vrot.slane %v97, %v186
    %v188 = vlaneseq
    %v189 = vshrl.u32 %v188, 7
    %v190 = vsub.s32 0, %v189
    %v191 = vrot.slane %v101, %v190
    %v192 = vlaneseq
    %v193 = vshrl.u32 %v192, 7
    %v194 = vsub.s32 0, %v193
    %v195 = vrot.slane %v105, %v194
    %v196 = vlaneseq
    %v197 = vshrl.u32 %v196, 7
    %v198 = vsub.s32 0, %v197
    %v199 = vrot.slane %v109, %v198
    %v200 = vlaneseq
    %v201 = vshrl.u32 %v200, 7
    %v202 = vsub.s32 0, %v201
    %v203 = vrot.slane %v113, %v202
    %v204 = vlaneseq
    %v205 = vshrl.u32 %v204, 7
    %v206 = vsub.s32 0, %v205
    %v207 = vrot.slane %v117, %v206
    %v208 = vlaneseq
    %v209 = vshrl.u32 %v208, 7
    %v210 = vsub.s32 0, %v209
    %v211 = vrot.slane %v121, %v210
    %v212 = vlaneseq
    %v213 = vshrl.u32 %v212, 7
    %v214 = vsub.s32 0, %v213
    %v215 = vrot.slane %v125, %v214
    %v216 = vlaneseq
    %v217 = vshrl.u32 %v216, 7
    %v218 = vsub.s32 0, %v217
    %v219 = vrot.slane %v129, %v218
    %v220 = vlaneseq
    %v221 = vshrl.u32 %v220, 7
    %v222 = vsub.s32 0, %v221
    %v223 = vrot.slane %v133, %v222
    %v224 = vlaneseq
    %v225 = vshrl.u32 %v224, 7
    %v226 = vsub.s32 0, %v225
    %v227 = vrot.slane %v137, %v226
    %v228 = vlaneseq
    %v229 = vshrl.u32 %v228, 7
    %v230 = vsub.s32 0, %v229
    %v231 = vrot.slane %v141, %v230
    %v232 = vlaneseq
    %v233 = vshrl.u32 %v232, 7
    %v234 = vsub.s32 0, %v233
    %v235 = vrot.slane %v145, %v234
    %v236 = vlaneseq
    %v237 = vshrl.u32 %v236, 7
    %v238 = vsub.s32 0, %v237
    %v239 = vrot.slane %v149, %v238
    %v240 = vlaneseq
    %v241 = vshrl.u32 %v240, 7
    %v242 = vsub.s32 0, %v241
    %v243 = vrot.slane %v153, %v242
    %v244 = vlaneseq
    %v245 = vshrl.u32 %v244, 7
    %v246 = vsub.s32 0, %v245
    %v247 = vrot.slane %v157, %v246
    %v248 = vlaneseq
    %v249 = vshrl.u32 %v248, 7
    %v250 = vsub.s32 0, %v249
    %v251 = vrot.slane %v161, %v250
    %v252 = vmul.f32 %v57, %v183
    %v253 = vmul.f32 %v58, %v187
    %v254 = vmul.f32 %v59, %v191
    %v255 = vmul.f32 %v60, %v195
    %v256 = vmul.f32 %v61, %v199
    %v257 = vmul.f32 %v62, %v203
    %v258 = vmul.f32 %v63, %v207
    %v259 = vmul.f32 %v64, %v211
    %v260 = vmul.f32 %v65, %v215
    %v261 = vmul.f32 %v66, %v219
    %v262 = vmul.f32 %v67, %v223
    %v263 = vmul.f32 %v68, %v227
    %v264 = vmul.f32 %v69, %v231
    %v265 = vmul.f32 %v70, %v235
    %v266 = vmul.f32 %v71, %v239
    %v267 = vmul.f32 %v72, %v243
    %v268 = vmul.f32 %v73, %v247
    %v269 = vmul.f32 %v74, %v251
    %v270 = vadd.f32 %v252, %v253
    %v271 = vadd.f32 %v270, %v254
    %v272 = vadd.f32 %v271, %v255
    %v273 = vadd.f32 %v272, %v256
    %v274 = vadd.f32 %v273, %v257
    %v275 = vadd.f32 %v274, %v258
    %v276 = vadd.f32 %v275, %v259
    %v277 = vadd.f32 %v276, %v260
    %v278 = vadd.f32 %v277, %v261
    %v279 = vadd.f32 %v278, %v262
    %v280 = vadd.f32 %v279, %v263
    %v281 = vadd.f32 %v280, %v264
    %v282 = vadd.f32 %v281, %v265
    %v283 = vadd.f32 %v282, %v266
    %v284 = vadd.f32 %v283, %v267
    %v285 = vadd.f32 %v284, %v268
    %v286 = vadd.f32 %v285, %v269
    %287 = vadd.xlane.f32.xlu0 %v286
    %v288 = vpop.xlane.xlu0 %287
    %v289 = vstv %s80
    %v290 = vadd.f32 %v288, %v289
    %v291 = vmax.f32 %v290, 0.0
    %v292 = vlaneseq
    %v293 = vshrl.u32 %v292, 7
    %v294 = vsub.s32 1, %v293
    %v295 = vrot.slane %v75, %v294
    %v296 = vlaneseq
    %v297 = vshrl.u32 %v296, 7
    %v298 = vsub.s32 3, %v297
    %v299 = vrot.slane %v75, %v298
    %v300 = vlaneseq
    %v301 = vshrl.u32 %v300, 7
    %v302 = vsub.s32 5, %v301
    %v303 = vrot.slane %v75, %v302
    %v304 = vlaneseq
    %v305 = vshrl.u32 %v304, 7
    %v306 = vsub.s32 7, %v305
    %v307 = vrot.slane %v75, %v306
    %v308 = vlaneseq
    %v309 = vshrl.u32 %v308, 7
    %v310 = vsub.s32 1, %v309
    %v311 = vrot.slane %v76, %v310
    %v312 = vlaneseq
    %v313 = vshrl.u32 %v312, 7
    %v314 = vsub.s32 3, %v313
    %v315 = vrot.slane %v76, %v314
    %v316 = vlaneseq
    %v317 = vshrl.u32 %v316, 7
    %v318 = vsub.s32 5, %v317
    %v319 = vrot.slane %v76, %v318
    %v320 = vlaneseq
    %v321 = vshrl.u32 %v320, 7
    %v322 = vsub.s32 7, %v321
    %v323 = vrot.slane %v76, %v322
    %v324 = vlaneseq
    %v325 = vshrl.u32 %v324, 7
    %v326 = vsub.s32 1, %v325
    %v327 = vrot.slane %v77, %v326
    %v328 = vlaneseq
    %v329 = vshrl.u32 %v328, 7
    %v330 = vsub.s32 3, %v329
    %v331 = vrot.slane %v77, %v330
    %v332 = vlaneseq
    %v333 = vshrl.u32 %v332, 7
    %v334 = vsub.s32 5, %v333
    %v335 = vrot.slane %v77, %v334
    %v336 = vlaneseq
    %v337 = vshrl.u32 %v336, 7
    %v338 = vsub.s32 7, %v337
    %v339 = vrot.slane %v77, %v338
    %v340 = vlaneseq
    %v341 = vshrl.u32 %v340, 7
    %v342 = vsub.s32 1, %v341
    %v343 = vrot.slane %v78, %v342
    %v344 = vlaneseq
    %v345 = vshrl.u32 %v344, 7
    %v346 = vsub.s32 3, %v345
    %v347 = vrot.slane %v78, %v346
    %v348 = vlaneseq
    %v349 = vshrl.u32 %v348, 7
    %v350 = vsub.s32 5, %v349
    %v351 = vrot.slane %v78, %v350
    %v352 = vlaneseq
    %v353 = vshrl.u32 %v352, 7
    %v354 = vsub.s32 7, %v353
    %v355 = vrot.slane %v78, %v354
    %v356 = vlaneseq
    %v357 = vshrl.u32 %v356, 7
    %v358 = vsub.s32 1, %v357
    %v359 = vrot.slane %v79, %v358
    %v360 = vlaneseq
    %v361 = vshrl.u32 %v360, 7
    %v362 = vsub.s32 3, %v361
    %v363 = vrot.slane %v79, %v362
    %v382 = vlaneseq
    %v383 = vshrl.u32 %v382, 7
    %v384 = vsub.s32 1, %v383
    %v385 = vrot.slane %v295, %v384
    %v386 = vlaneseq
    %v387 = vshrl.u32 %v386, 7
    %v388 = vsub.s32 1, %v387
    %v389 = vrot.slane %v299, %v388
    %v390 = vlaneseq
    %v391 = vshrl.u32 %v390, 7
    %v392 = vsub.s32 1, %v391
    %v393 = vrot.slane %v303, %v392
    %v394 = vlaneseq
    %v395 = vshrl.u32 %v394, 7
    %v396 = vsub.s32 1, %v395
    %v397 = vrot.slane %v307, %v396
    %v398 = vlaneseq
    %v399 = vshrl.u32 %v398, 7
    %v400 = vsub.s32 1, %v399
    %v401 = vrot.slane %v311, %v400
    %v402 = vlaneseq
    %v403 = vshrl.u32 %v402, 7
    %v404 = vsub.s32 1, %v403
    %v405 = vrot.slane %v315, %v404
    %v406 = vlaneseq
    %v407 = vshrl.u32 %v406, 7
    %v408 = vsub.s32 1, %v407
    %v409 = vrot.slane %v319, %v408
    %v410 = vlaneseq
    %v411 = vshrl.u32 %v410, 7
    %v412 = vsub.s32 1, %v411
    %v413 = vrot.slane %v323, %v412
    %v414 = vlaneseq
    %v415 = vshrl.u32 %v414, 7
    %v416 = vsub.s32 1, %v415
    %v417 = vrot.slane %v327, %v416
    %v418 = vlaneseq
    %v419 = vshrl.u32 %v418, 7
    %v420 = vsub.s32 1, %v419
    %v421 = vrot.slane %v331, %v420
    %v422 = vlaneseq
    %v423 = vshrl.u32 %v422, 7
    %v424 = vsub.s32 1, %v423
    %v425 = vrot.slane %v335, %v424
    %v426 = vlaneseq
    %v427 = vshrl.u32 %v426, 7
    %v428 = vsub.s32 1, %v427
    %v429 = vrot.slane %v339, %v428
    %v430 = vlaneseq
    %v431 = vshrl.u32 %v430, 7
    %v432 = vsub.s32 1, %v431
    %v433 = vrot.slane %v343, %v432
    %v434 = vlaneseq
    %v435 = vshrl.u32 %v434, 7
    %v436 = vsub.s32 1, %v435
    %v437 = vrot.slane %v347, %v436
    %v438 = vlaneseq
    %v439 = vshrl.u32 %v438, 7
    %v440 = vsub.s32 1, %v439
    %v441 = vrot.slane %v351, %v440
    %v442 = vlaneseq
    %v443 = vshrl.u32 %v442, 7
    %v444 = vsub.s32 1, %v443
    %v445 = vrot.slane %v355, %v444
    %v446 = vlaneseq
    %v447 = vshrl.u32 %v446, 7
    %v448 = vsub.s32 1, %v447
    %v449 = vrot.slane %v359, %v448
    %v450 = vlaneseq
    %v451 = vshrl.u32 %v450, 7
    %v452 = vsub.s32 1, %v451
    %v453 = vrot.slane %v363, %v452
    %v454 = vmul.f32 %v57, %v385
    %v455 = vmul.f32 %v58, %v389
    %v456 = vmul.f32 %v59, %v393
    %v457 = vmul.f32 %v60, %v397
    %v458 = vmul.f32 %v61, %v401
    %v459 = vmul.f32 %v62, %v405
    %v460 = vmul.f32 %v63, %v409
    %v461 = vmul.f32 %v64, %v413
    %v462 = vmul.f32 %v65, %v417
    %v463 = vmul.f32 %v66, %v421
    %v464 = vmul.f32 %v67, %v425
    %v465 = vmul.f32 %v68, %v429
    %v466 = vmul.f32 %v69, %v433
    %v467 = vmul.f32 %v70, %v437
    %v468 = vmul.f32 %v71, %v441
    %v469 = vmul.f32 %v72, %v445
    %v470 = vmul.f32 %v73, %v449
    %v471 = vmul.f32 %v74, %v453
    %v472 = vadd.f32 %v454, %v455
    %v473 = vadd.f32 %v472, %v456
    %v474 = vadd.f32 %v473, %v457
    %v475 = vadd.f32 %v474, %v458
    %v476 = vadd.f32 %v475, %v459
    %v477 = vadd.f32 %v476, %v460
    %v478 = vadd.f32 %v477, %v461
    %v479 = vadd.f32 %v478, %v462
    %v480 = vadd.f32 %v479, %v463
    %v481 = vadd.f32 %v480, %v464
    %v482 = vadd.f32 %v481, %v465
    %v483 = vadd.f32 %v482, %v466
    %v484 = vadd.f32 %v483, %v467
    %v485 = vadd.f32 %v484, %v468
    %v486 = vadd.f32 %v485, %v469
    %v487 = vadd.f32 %v486, %v470
    %v488 = vadd.f32 %v487, %v471
    %489 = vadd.xlane.f32.xlu0 %v488
    %v490 = vpop.xlane.xlu0 %489
    %v491 = vstv %s81
    %v492 = vadd.f32 %v490, %v491
    %v493 = vmax.f32 %v492, 0.0
    %v494 = vstv %s82
    %v495 = vmul.f32 %v291, %v494
    %v496 = vstv %s83
    %v497 = vmul.f32 %v493, %v496
    %v498 = vadd.f32 %v495, %v497
    %v499 = vstv %s84
    %v500 = vadd.f32 %v498, %v499
    %v501 = vsub.f32 0.0, %v500
    %v502 = vmul.f32 %v501, 1.442695
    %v503 = vpow.pop %v502
    %v504 = vadd.f32 %v503, 1.0
    %v505 = vrcp.pop %v504
    %v506 = vmul.f32 1.0, %v505
    %vm507 = vcmask 7168
    %508 = vst.msk [vmem:[%s4] sm:$0xff] %vm507, %v506
    %v509 = vld [vmem:[%s2] sm:$0xff]
    %v510 = vand.u32 2147483647, %v500
    %v511 = vsub.f32 0.0, %v510
    %v512 = vmul.f32 %v511, 1.442695
    %v513 = vpow.pop %v512
    %v514 = vadd.f32 %v513, 1.0
    %v515 = vlog2.pop %v514
    %v516 = vmul.f32 %v515, 0.6931472
    %v517 = vmax.f32 %v501, 0.0
    %v518 = vadd.f32 %v517, %v516
    %v519 = vsub.f32 0.0, %v518
    %v520 = vmax.f32 %v519, -100.0
    %v521 = vmax.f32 %v500, 0.0
    %v522 = vadd.f32 %v521, %v516
    %v523 = vsub.f32 0.0, %v522
    %v524 = vmax.f32 %v523, -100.0
    %v525 = vmul.f32 %v509, %v520
    %v526 = vsub.f32 1.0, %v509
    %v527 = vmul.f32 %v526, %v524
    %v528 = vadd.f32 %v525, %v527
    %v529 = vsub.f32 0.0, %v528
    %v530 = vsel %vm507, %v529, 0.0
    %531 = vadd.xlane.f32.xlu0 %v530
    %v532 = vpop.xlane.xlu0 %531
    %v533 = vrot.slane %v532, 4
    %v534 = vadd.f32 %v532, %v533
    %v535 = vrot.slane %v534, 2
    %v536 = vadd.f32 %v534, %v535
    %v537 = vrot.slane %v536, 1
    %v538 = vadd.f32 %v536, %v537
    %s539 = vtos %v538
    %s540 = scalar_lea.smem [#allocation9], 0
    %541 = sst [smem:[%s540]] %s539
    // Predicated region
    $region30: #{tpu_custom_call.1} parent=1 // pred_check
      _
    $region31: #{tpu_custom_call.1} parent=1 // pred_check_branch
      %543 = sbr.rel (0) target = $region33
    $region32: #{tpu_custom_call.1} parent=1 // pred_region
      _
    $region33: #{tpu_custom_call.1} parent=1 // pred_fallthru
      _
    // Predicated region
    $region34: #{tpu_custom_call.1} parent=1 // pred_check
      _
    $region35: #{tpu_custom_call.1} parent=1 // pred_check_branch
      %545 = sbr.rel (0) target = $region37
    $region36: #{tpu_custom_call.1} parent=1 // pred_region
      %s547 = ssub.s32 16, 16
      %548 = vsyncadd [#allocation4], %s547
      %551 = dma.smem_to_hbm [#allocation9], 16, %s5, [#allocation4]
    $region37: #{tpu_custom_call.1} parent=1 // pred_fallthru
      _
    // Predicated region
    $region38: #{tpu_custom_call.1} parent=1 // pred_check
      _
    $region39: #{tpu_custom_call.1} parent=1 // pred_check_branch
      %553 = sbr.rel (0) target = $region41
    $region40: #{tpu_custom_call.1} parent=1 // pred_region
      _
    $region41: #{tpu_custom_call.1} parent=1 // pred_fallthru
      _
    // Predicated region
    $region42: #{tpu_custom_call.1} parent=1 // pred_check
      _
    $region43: #{tpu_custom_call.1} parent=1 // pred_check_branch
      %555 = sbr.rel (0) target = $region45
    $region44: #{tpu_custom_call.1} parent=1 // pred_region
      %556 = dma.done [#allocation4], 16
    $region45: #{tpu_custom_call.1} parent=1 // pred_fallthru
      _
    %557 = sfence
    %558 = vsyncpa [#allocation3], 1
    %559 = vsyncpa [#allocation8], 1
    %560 = vsyncpa [#allocation4], 1
    %561 = vsyncpa [#allocation5], 1

</llo_original>
